<compile_context>
chip_gen: v6e
topology: v6e:2x2x1
jax: 0.10.0
libtpu: 0.0.40
codegen_flags: <defaults>
</compile_context>

<pallas_src>
import math

import jax
import jax.numpy as jnp
from jax.experimental import pallas as pl
from jax.experimental.pallas import tpu as pltpu

_LANES = 128
_SUBLANES = 8
# 8192 x 128 f32 = 4 MiB per input per pipeline buffer.  3 inputs x 2 buffers
# = 24 MiB of double-buffered VMEM -> fits under the explicit 32 MiB limit on
# every generation.
_MAX_BLOCK_ROWS = 8192
_VMEM_LIMIT_BYTES = 32 * 1024 * 1024
# Only split the row range across the two v7x TensorCores when there are
# enough steps that the (at most one) redundant fully-masked step is noise.
_MIN_BLOCKS_FOR_SPLIT = 8
# Below this element count a fused XLA reduction beats a pallas_call launch.
_PALLAS_MIN_ELEMENTS = 1 << 16


def _to_slab(a):
    """Flatten to a lane-dense (rows, 128) slab with rows % 8 == 0.

    Pads (with zeros) only when the element count is not a multiple of 1024 —
    a no-op for typical NN shapes, including the (2, 4, 16, 16) default.
    """
    flat = a.reshape(-1)
    n = flat.shape[0]
    chunk = _SUBLANES * _LANES
    padded = ((n + chunk - 1) // chunk) * chunk
    if padded != n:
        flat = jnp.pad(flat, (0, padded - n))
    return flat.reshape(-1, _LANES), n


def weighted_mse_loss(inp, target, weight, *, block_rows=None, force_pallas=False):
    n_elems = math.prod(inp.shape)
    n_weight = math.prod(weight.shape)

    if not force_pallas and max(n_elems, n_weight) < _PALLAS_MIN_ELEMENTS:
        # Tiny-input latency path: a single fused XLA reduction wins over a
        # pallas_call launch.
        x = inp.astype(jnp.float32)
        t = target.astype(jnp.float32)
        w = weight.astype(jnp.float32)
        return jnp.mean(jnp.square(x - t)) * jnp.mean(w)

    x2d, _ = _to_slab(inp)
    t2d, _ = _to_slab(target)
    w2d, _ = _to_slab(weight)

    # input/target always match; weight may differ in size (the reference
    # broadcasts a scalar loss over it).  Only in that uncommon case pad the
    # shorter slab — zero rows contribute 0 to each sum and the divisors below
    # use the true element counts.
    rows = max(x2d.shape[0], w2d.shape[0])
    if x2d.shape[0] != rows:
        x2d = jnp.pad(x2d, ((0, rows - x2d.shape[0]), (0, 0)))
        t2d = jnp.pad(t2d, ((0, rows - t2d.shape[0]), (0, 0)))
    if w2d.shape[0] != rows:
        w2d = jnp.pad(w2d, ((0, rows - w2d.shape[0]), (0, 0)))

    # --- tiling --------------------------------------------------------------
    if block_rows is None:
        block_rows = _MAX_BLOCK_ROWS
    block_rows = max(_SUBLANES, (block_rows // _SUBLANES) * _SUBLANES)
    block_rows = min(block_rows, rows)

    nblocks = (rows + block_rows - 1) // block_rows
    num_splits = 2 if nblocks >= _MIN_BLOCKS_FOR_SPLIT else 1
    steps_per_split = (nblocks + num_splits - 1) // num_splits

    # Masking is only needed when the last tile is ragged or the core split
    # leaves a fully-out-of-range step; both conditions are static.
    needs_mask = (rows % block_rows != 0) or (num_splits * steps_per_split != nblocks)

    def kernel(x_ref, t_ref, w_ref, sq_ref, ws_ref, sq_acc, w_acc):
        c = pl.program_id(0)
        i = pl.program_id(1)

        @pl.when(i == 0)
        def _init():
            sq_acc[...] = jnp.zeros_like(sq_acc)
            w_acc[...] = jnp.zeros_like(w_acc)

        # Cast BEFORE subtracting so bf16/fp16 inputs do not lose precision to
        # cancellation in the narrow dtype.
        x = x_ref[...].astype(jnp.float32)
        t = t_ref[...].astype(jnp.float32)
        w = w_ref[...].astype(jnp.float32)
        d = x - t
        sq = d * d

        if needs_mask:
            # Rows at/after `rows` belong to the ragged overhang (undefined
            # DMA contents) or to a fully-out-of-range step: zero them out.
            step = c * steps_per_split + i          # global block index
            rem = rows - step * block_rows          # valid rows in this tile
            row_ids = jax.lax.broadcasted_iota(jnp.int32, (block_rows, 1), 0)
            live = row_ids < rem
            sq = jnp.where(live, sq, 0.0)
            w = jnp.where(live, w, 0.0)

        # Fold (block_rows, 128) -> (8, 128): the reshape only splits the
        # leading (vreg-index) dim, so the axis-0 sum is plain VPU vreg adds —
        # no XLU and no scalar read-modify-write in the steady-state loop.
        sq_acc[...] += jnp.sum(sq.reshape(-1, _SUBLANES, _LANES), axis=0)
        w_acc[...] += jnp.sum(w.reshape(-1, _SUBLANES, _LANES), axis=0)

        @pl.when(i == pl.num_programs(1) - 1)
        def _finalize():
            # Single cross-lane (XLU) reduction, once per core.
            sq_ref[0, 0] = jnp.sum(sq_acc[...])
            ws_ref[0, 0] = jnp.sum(w_acc[...])

    # Steps past the real block range are clamped to the last block; their
    # contribution is fully masked inside the kernel.
    def tile_index(c, i):
        return (jnp.minimum(c * steps_per_split + i, nblocks - 1), 0)

    tile_spec = pl.BlockSpec((block_rows, _LANES), tile_index)
    part_spec = pl.BlockSpec(
        (1, 1), lambda c, i: (c, 0), memory_space=pltpu.MemorySpace.SMEM
    )

    sq_parts, w_parts = pl.pallas_call(
        kernel,
        grid=(num_splits, steps_per_split),
        in_specs=[tile_spec, tile_spec, tile_spec],
        out_specs=[part_spec, part_spec],
        out_shape=(
            jax.ShapeDtypeStruct((num_splits, 1), jnp.float32),
            jax.ShapeDtypeStruct((num_splits, 1), jnp.float32),
        ),
        scratch_shapes=[
            pltpu.VMEM((_SUBLANES, _LANES), jnp.float32),
            pltpu.VMEM((_SUBLANES, _LANES), jnp.float32),
        ],
        compiler_params=pltpu.CompilerParams(
            dimension_semantics=("parallel", "arbitrary"),
            vmem_limit_bytes=_VMEM_LIMIT_BYTES,
        ),
    )(x2d, t2d, w2d)

    # TODO(synk): jnp.float32(n) is inexact above 2^24 elements (negligible
    # relative error for a mean, but worth noting for huge inputs).
    mse = jnp.sum(sq_parts) / jnp.float32(n_elems)
    w_mean = jnp.sum(w_parts) / jnp.float32(n_weight)
    return mse * w_mean


if __name__ == "__main__":
    key = jax.random.PRNGKey(0)
    k1, k2, k3 = jax.random.split(key, 3)

    # NCHW-like small shapes from the reference module.
    shape = (2, 4, 16, 16)
    inp = jax.random.normal(k1, shape, dtype=jnp.float32)
    target = jax.random.normal(k2, shape, dtype=jnp.float32)
    weight = jax.random.uniform(k3, shape, dtype=jnp.float32)

    ref = jnp.mean(jnp.square(inp - target)) * jnp.mean(weight)

    # 1) Pallas path at the module's shape (single tile, one grid step).
    out = weighted_mse_loss(inp, target, weight, force_pallas=True)
    out = jax.block_until_ready(out)
    assert jnp.allclose(out, ref, rtol=1e-5, atol=1e-6), (out, ref)

    # 2) Default path (tiny input -> pure-JAX fallback).
    out_fb = jax.block_until_ready(weighted_mse_loss(inp, target, weight))
    assert jnp.allclose(out_fb, ref, rtol=1e-5, atol=1e-6), (out_fb, ref)

    # 3) Multi-step path with a ragged last tile, the clamped out-of-range
    #    step, and the two-way ("parallel") core split — exercised at a small
    #    size by forcing a small block_rows.
    shape2 = (2, 4, 50, 128)  # 51200 elements -> 400 slab rows
    i2 = jax.random.normal(k1, shape2, dtype=jnp.float32)
    t2 = jax.random.normal(k2, shape2, dtype=jnp.float32)
    w2 = jax.random.uniform(k3, shape2, dtype=jnp.float32)
    ref2 = jnp.mean(jnp.square(i2 - t2)) * jnp.mean(w2)
    out2 = weighted_mse_loss(i2, t2, w2, force_pallas=True, block_rows=48)
    out2 = jax.block_until_ready(out2)
    assert jnp.allclose(out2, ref2, rtol=1e-4, atol=1e-6), (out2, ref2)

    print("KERNEL_OK")
</pallas_src>

<mosaic_0001>
module attributes {stable_mosaic.version = 11 : i64} {
  func.func @kernel(%arg0: i32, %arg1: i32, %arg2: memref<16x128xf32, #tpu.memory_space<vmem>>, %arg3: memref<16x128xf32, #tpu.memory_space<vmem>>, %arg4: memref<16x128xf32, #tpu.memory_space<vmem>>, %arg5: memref<1x1xf32, #tpu.memory_space<smem>>, %arg6: memref<1x1xf32, #tpu.memory_space<smem>>, %arg7: memref<8x128xf32, #tpu.memory_space<vmem>>, %arg8: memref<8x128xf32, #tpu.memory_space<vmem>>) attributes {dimension_semantics = [#tpu.dimension_semantics<parallel>, #tpu.dimension_semantics<arbitrary>], iteration_bounds = array<i64: 1, 1>, scalar_prefetch = 0 : i64, scratch_operands = 2 : i64, tpu.core_type = #tpu.core_type<tc>, window_params = [{transform_indices = @transform_0, window_bounds = array<i64: 16, 128>}, {transform_indices = @transform_1, window_bounds = array<i64: 16, 128>}, {transform_indices = @transform_2, window_bounds = array<i64: 16, 128>}, {transform_indices = @transform_3, window_bounds = array<i64: 1, 1>}, {transform_indices = @transform_4, window_bounds = array<i64: 1, 1>}]} {
    %c0_i32 = arith.constant 0 : i32
    %0 = arith.cmpi eq, %arg1, %c0_i32 : i32
    %1 = arith.extui %0 : i1 to i32
    %c0_i32_0 = arith.constant 0 : i32
    %2 = arith.cmpi ne, %1, %c0_i32_0 : i32
    scf.if %2 {
      %cst_17 = arith.constant 0.000000e+00 : f32
      %21 = vector.broadcast %cst_17 : f32 to vector<8x128xf32>
      %c0_18 = arith.constant 0 : index
      %c0_19 = arith.constant 0 : index
      %22 = vector.load %arg7[%c0_18, %c0_19] : memref<8x128xf32, #tpu.memory_space<vmem>>, vector<8x128xf32>
      tpu.vector_store %arg7[%c0_18, %c0_19], %21 {strides = array<i32>} : memref<8x128xf32, #tpu.memory_space<vmem>>, vector<8x128xf32>,
      %cst_20 = arith.constant 0.000000e+00 : f32
      %23 = vector.broadcast %cst_20 : f32 to vector<8x128xf32>
      %c0_21 = arith.constant 0 : index
      %c0_22 = arith.constant 0 : index
      %24 = vector.load %arg8[%c0_21, %c0_22] : memref<8x128xf32, #tpu.memory_space<vmem>>, vector<8x128xf32>
      tpu.vector_store %arg8[%c0_21, %c0_22], %23 {strides = array<i32>} : memref<8x128xf32, #tpu.memory_space<vmem>>, vector<8x128xf32>,
    } else {
    }
    %c0 = arith.constant 0 : index
    %c0_1 = arith.constant 0 : index
    %3 = vector.load %arg2[%c0, %c0_1] : memref<16x128xf32, #tpu.memory_space<vmem>>, vector<16x128xf32>
    %c0_2 = arith.constant 0 : index
    %c0_3 = arith.constant 0 : index
    %4 = vector.load %arg3[%c0_2, %c0_3] : memref<16x128xf32, #tpu.memory_space<vmem>>, vector<16x128xf32>
    %c0_4 = arith.constant 0 : index
    %c0_5 = arith.constant 0 : index
    %5 = vector.load %arg4[%c0_4, %c0_5] : memref<16x128xf32, #tpu.memory_space<vmem>>, vector<16x128xf32>
    %6 = arith.subf %3, %4 : vector<16x128xf32>
    %7 = arith.mulf %6, %6 : vector<16x128xf32>
    %c0_6 = arith.constant 0 : index
    %c0_7 = arith.constant 0 : index
    %8 = vector.load %arg7[%c0_6, %c0_7] : memref<8x128xf32, #tpu.memory_space<vmem>>, vector<8x128xf32>
    %9 = vector.shape_cast %7 : vector<16x128xf32> to vector<2x8x128xf32>
    %cst = arith.constant dense<0.000000e+00> : vector<8x128xf32>
    %10 = vector.multi_reduction <add>, %9, %cst [0] : vector<2x8x128xf32> to vector<8x128xf32>
    %11 = arith.addf %8, %10 : vector<8x128xf32>
    %c0_8 = arith.constant 0 : index
    %c0_9 = arith.constant 0 : index
    %12 = vector.load %arg7[%c0_8, %c0_9] : memref<8x128xf32, #tpu.memory_space<vmem>>, vector<8x128xf32>
    tpu.vector_store %arg7[%c0_8, %c0_9], %11 {strides = array<i32>} : memref<8x128xf32, #tpu.memory_space<vmem>>, vector<8x128xf32>,
    %c0_10 = arith.constant 0 : index
    %c0_11 = arith.constant 0 : index
    %13 = vector.load %arg8[%c0_10, %c0_11] : memref<8x128xf32, #tpu.memory_space<vmem>>, vector<8x128xf32>
    %14 = vector.shape_cast %5 : vector<16x128xf32> to vector<2x8x128xf32>
    %cst_12 = arith.constant dense<0.000000e+00> : vector<8x128xf32>
    %15 = vector.multi_reduction <add>, %14, %cst_12 [0] : vector<2x8x128xf32> to vector<8x128xf32>
    %16 = arith.addf %13, %15 : vector<8x128xf32>
    %c0_13 = arith.constant 0 : index
    %c0_14 = arith.constant 0 : index
    %17 = vector.load %arg8[%c0_13, %c0_14] : memref<8x128xf32, #tpu.memory_space<vmem>>, vector<8x128xf32>
    tpu.vector_store %arg8[%c0_13, %c0_14], %16 {strides = array<i32>} : memref<8x128xf32, #tpu.memory_space<vmem>>, vector<8x128xf32>,
    %c0_i32_15 = arith.constant 0 : i32
    %18 = arith.cmpi eq, %arg1, %c0_i32_15 : i32
    %19 = arith.extui %18 : i1 to i32
    %c0_i32_16 = arith.constant 0 : i32
    %20 = arith.cmpi ne, %19, %c0_i32_16 : i32
    scf.if %20 {
      %c0_17 = arith.constant 0 : index
      %c0_18 = arith.constant 0 : index
      %21 = vector.load %arg7[%c0_17, %c0_18] : memref<8x128xf32, #tpu.memory_space<vmem>>, vector<8x128xf32>
      %22 = vector.shape_cast %21 : vector<8x128xf32> to vector<1x8x128xf32>
      %cst_19 = arith.constant dense<0.000000e+00> : vector<1xf32>
      %23 = vector.multi_reduction <add>, %22, %cst_19 [1, 2] : vector<1x8x128xf32> to vector<1xf32>
      %24 = vector.shape_cast %23 : vector<1xf32> to vector<1x1x1xf32>
      %25 = vector.extract %24[0, 0, 0] : f32 from vector<1x1x1xf32>
      %c0_20 = arith.constant 0 : index
      %c0_21 = arith.constant 0 : index
      %26 = memref.load %arg5[%c0_20, %c0_21] : memref<1x1xf32, #tpu.memory_space<smem>>
      memref.store %25, %arg5[%c0_20, %c0_21] : memref<1x1xf32, #tpu.memory_space<smem>>
      %c0_22 = arith.constant 0 : index
      %c0_23 = arith.constant 0 : index
      %27 = vector.load %arg8[%c0_22, %c0_23] : memref<8x128xf32, #tpu.memory_space<vmem>>, vector<8x128xf32>
      %28 = vector.shape_cast %27 : vector<8x128xf32> to vector<1x8x128xf32>
      %cst_24 = arith.constant dense<0.000000e+00> : vector<1xf32>
      %29 = vector.multi_reduction <add>, %28, %cst_24 [1, 2] : vector<1x8x128xf32> to vector<1xf32>
      %30 = vector.shape_cast %29 : vector<1xf32> to vector<1x1x1xf32>
      %31 = vector.extract %30[0, 0, 0] : f32 from vector<1x1x1xf32>
      %c0_25 = arith.constant 0 : index
      %c0_26 = arith.constant 0 : index
      %32 = memref.load %arg6[%c0_25, %c0_26] : memref<1x1xf32, #tpu.memory_space<smem>>
      memref.store %31, %arg6[%c0_25, %c0_26] : memref<1x1xf32, #tpu.memory_space<smem>>
    } else {
    }
    return
  }
  func.func @transform_0(%arg0: i32, %arg1: i32) -> (i32, i32) {
    %c1_i32 = arith.constant 1 : i32
    %0 = arith.muli %arg0, %c1_i32 : i32
    %1 = arith.addi %0, %arg1 : i32
    %c0_i32 = arith.constant 0 : i32
    %2 = arith.minsi %1, %c0_i32 : i32
    %c0_i32_0 = arith.constant 0 : i32
    %c0_i32_1 = arith.constant 0 : i32
    return %2, %c0_i32_0 : i32, i32
  }
  func.func @transform_1(%arg0: i32, %arg1: i32) -> (i32, i32) {
    %c1_i32 = arith.constant 1 : i32
    %0 = arith.muli %arg0, %c1_i32 : i32
    %1 = arith.addi %0, %arg1 : i32
    %c0_i32 = arith.constant 0 : i32
    %2 = arith.minsi %1, %c0_i32 : i32
    %c0_i32_0 = arith.constant 0 : i32
    %c0_i32_1 = arith.constant 0 : i32
    return %2, %c0_i32_0 : i32, i32
  }
  func.func @transform_2(%arg0: i32, %arg1: i32) -> (i32, i32) {
    %c1_i32 = arith.constant 1 : i32
    %0 = arith.muli %arg0, %c1_i32 : i32
    %1 = arith.addi %0, %arg1 : i32
    %c0_i32 = arith.constant 0 : i32
    %2 = arith.minsi %1, %c0_i32 : i32
    %c0_i32_0 = arith.constant 0 : i32
    %c0_i32_1 = arith.constant 0 : i32
    return %2, %c0_i32_0 : i32, i32
  }
  func.func @transform_3(%arg0: i32, %arg1: i32) -> (i32, i32) {
    %c0_i32 = arith.constant 0 : i32
    %c0_i32_0 = arith.constant 0 : i32
    return %arg0, %c0_i32 : i32, i32
  }
  func.func @transform_4(%arg0: i32, %arg1: i32) -> (i32, i32) {
    %c0_i32 = arith.constant 0 : i32
    %c0_i32_0 = arith.constant 0 : i32
    return %arg0, %c0_i32 : i32, i32
  }
}

</mosaic_0001>

<llo_original>
// kernel: tpu_custom_call.1
$region0: #{tpu_custom_call.1}
  #allocation0 [shape = 'u32[]', space=smem, size = 0x4, offset = 0x4, fixed_abs, tag = 'smem constant byte address 0x4 - core index']
  #allocation1 [shape = 'u32[144,128]{1,0:T(1,128)}', space=vmem, size = 0x12000, scoped, tag = 'internal scratch']
  #allocation2 [shape = 'f32[8,128]{1,0:T(8,128)}', space=vmem, size = 0x1000, scoped, tag = 'scratch operand']
  #allocation3 [shape = 'f32[8,128]{1,0:T(8,128)}', space=vmem, size = 0x1000, scoped, tag = 'scratch operand']
  %s0 = inlined_call_operand.hbm [shape: f32[16,128], index: 0, kind: input, shape index: {}]
  %s1 = inlined_call_operand.hbm [shape: f32[16,128], index: 1, kind: input, shape index: {}]
  %s2 = inlined_call_operand.hbm [shape: f32[16,128], index: 2, kind: input, shape index: {}]
  %s3 = inlined_call_operand.hbm [shape: f32[1,1], index: 3, kind: output, shape index: {0}]
  %s4 = inlined_call_operand.hbm [shape: f32[1,1], index: 4, kind: output, shape index: {1}]
  %5 = xla_tuple %s3, %s4
  %s6 = sld [smem:[#allocation0]]
  $region50: #{tpu_custom_call.1} parent=0
    _
  %s8 = ssub.s32 1, %s6
  %s9 = scalar_select 0, %s8, %s6
  $region1: #{tpu_custom_call.1} parent=0
    #allocation4 [shape = 'u8[8192]{0}', space=vmem, size = 0x2000, scoped, tag = 'input window, operand 0, single buffered']
    #allocation5 [shape = 's32[1]{0}', space=sflag, size = 0x4, scoped, tag = 'scoped memory for tpu_custom_call.1']
    #allocation6 [shape = 's32[1]{0}', space=sflag, size = 0x4, scoped, tag = 'scoped memory for tpu_custom_call.1']
    #allocation7 [shape = 'u8[8192]{0}', space=vmem, size = 0x2000, scoped, tag = 'input window, operand 1, single buffered']
    #allocation8 [shape = 's32[1]{0}', space=sflag, size = 0x4, scoped, tag = 'scoped memory for tpu_custom_call.1']
    #allocation9 [shape = 'u8[8192]{0}', space=vmem, size = 0x2000, scoped, tag = 'input window, operand 2, single buffered']
    #allocation10 [shape = 'u8[512]{0}', space=smem, size = 0x200, scoped, tag = 'output window, operand 0, single buffered']
    #allocation11 [shape = 'u8[512]{0}', space=smem, size = 0x200, scoped, tag = 'output window, operand 1, single buffered']
    #allocation12 [shape = 's32[1]{0}', space=sflag, size = 0x4, scoped, tag = 'scoped memory for tpu_custom_call.1']
    %10 = vsyncpa [#allocation5], 0
    %11 = vsyncpa [#allocation8], 0
    %12 = vsyncpa [#allocation6], 0
    %13 = vsyncpa [#allocation12], 0
    // Predicated region
    $region2: #{tpu_custom_call.1} parent=1 // pred_check
      _
    $region3: #{tpu_custom_call.1} parent=1 // pred_check_branch
      %15 = sbr.rel (0) target = $region5
    $region4: #{tpu_custom_call.1} parent=1 // pred_region
      %s16 = sadd.s32 0, 0
      %p17 = scmp.lt.s32.totalorder %s16, 0
      %s18 = scalar_select %p17, %s16, 0
      %s19 = smul.u32 2, %s18
      %s21 = ssub.s32 256, 256
      %22 = vsyncadd [#allocation5], %s21
      %s23 = smul.addr %s19, 128
      %s24 = scalar_lea.hbm %s0, %s23
      %s25 = sshll.u32 [#allocation4], 4
      %s26 = int_to_ptr.vmem [resolvable:$true] %s25
      %31 = dma.hbm_to_vmem [thread:$0]  %s24, 256, %s26, [#allocation5], 128, 128, 8
    $region5: #{tpu_custom_call.1} parent=1 // pred_fallthru
      _
    // Predicated region
    $region6: #{tpu_custom_call.1} parent=1 // pred_check
      _
    $region7: #{tpu_custom_call.1} parent=1 // pred_check_branch
      %33 = sbr.rel (0) target = $region9
    $region8: #{tpu_custom_call.1} parent=1 // pred_region
      %s34 = sadd.s32 0, 0
      %p35 = scmp.lt.s32.totalorder %s34, 0
      %s36 = scalar_select %p35, %s34, 0
      %s37 = smul.u32 2, %s36
      %s39 = ssub.s32 256, 256
      %40 = vsyncadd [#allocation8], %s39
      %s41 = smul.addr %s37, 128
      %s42 = scalar_lea.hbm %s1, %s41
      %s43 = sshll.u32 [#allocation7], 4
      %s44 = int_to_ptr.vmem [resolvable:$true] %s43
      %49 = dma.hbm_to_vmem [thread:$0]  %s42, 256, %s44, [#allocation8], 128, 128, 8
    $region9: #{tpu_custom_call.1} parent=1 // pred_fallthru
      _
    // Predicated region
    $region10: #{tpu_custom_call.1} parent=1 // pred_check
      _
    $region11: #{tpu_custom_call.1} parent=1 // pred_check_branch
      %51 = sbr.rel (0) target = $region13
    $region12: #{tpu_custom_call.1} parent=1 // pred_region
      %s52 = sadd.s32 0, 0
      %p53 = scmp.lt.s32.totalorder %s52, 0
      %s54 = scalar_select %p53, %s52, 0
      %s55 = smul.u32 2, %s54
      %s57 = ssub.s32 256, 256
      %58 = vsyncadd [#allocation8], %s57
      %s59 = smul.addr %s55, 128
      %s60 = scalar_lea.hbm %s2, %s59
      %s61 = sshll.u32 [#allocation9], 4
      %s62 = int_to_ptr.vmem [resolvable:$true] %s61
      %67 = dma.hbm_to_vmem [thread:$0]  %s60, 256, %s62, [#allocation8], 128, 128, 8
    $region13: #{tpu_custom_call.1} parent=1 // pred_fallthru
      _
    // Predicated region
    $region14: #{tpu_custom_call.1} parent=1 // pred_check
      _
    $region15: #{tpu_custom_call.1} parent=1 // pred_check_branch
      %69 = sbr.rel (0) target = $region17
    $region16: #{tpu_custom_call.1} parent=1 // pred_region
      %70 = dma.done [#allocation5], 256
    $region17: #{tpu_custom_call.1} parent=1 // pred_fallthru
      _
    // Predicated region
    $region18: #{tpu_custom_call.1} parent=1 // pred_check
      _
    $region19: #{tpu_custom_call.1} parent=1 // pred_check_branch
      %72 = sbr.rel (0) target = $region21
    $region20: #{tpu_custom_call.1} parent=1 // pred_region
      %73 = dma.done [#allocation8], 256
    $region21: #{tpu_custom_call.1} parent=1 // pred_fallthru
      _
    // Predicated region
    $region22: #{tpu_custom_call.1} parent=1 // pred_check
      _
    $region23: #{tpu_custom_call.1} parent=1 // pred_check_branch
      %75 = sbr.rel (0) target = $region25
    $region24: #{tpu_custom_call.1} parent=1 // pred_region
      %76 = dma.done [#allocation8], 256
    $region25: #{tpu_custom_call.1} parent=1 // pred_fallthru
      _
    %s77 = sadd.s32 0, 0
    %p78 = scmp.lt.s32.totalorder %s77, 0
    %s79 = scalar_select %p78, %s77, 0
    %s80 = smul.u32 2, %s79
    %s81 = sadd.s32 0, 0
    %p82 = scmp.lt.s32.totalorder %s81, 0
    %s83 = scalar_select %p82, %s81, 0
    %s84 = smul.u32 2, %s83
    %s85 = sadd.s32 0, 0
    %p86 = scmp.lt.s32.totalorder %s85, 0
    %s87 = scalar_select %p86, %s85, 0
    %s88 = smul.u32 2, %s87
    %p89 = scmp.eq.s32.totalorder 0, 0
    // Predicated region
    $region26: #{tpu_custom_call.1} parent=1 // pred_check
      %p90 = pneg %p89
    $region27: #{tpu_custom_call.1} parent=1 // pred_check_branch
      %92 = sbr.rel (%p90) target = $region29
    $region28: #{tpu_custom_call.1} parent=1 // pred_region
      %93 = vst [vmem:[#allocation2] sm:$0xff] 0.0
      %94 = vst [vmem:[#allocation3] sm:$0xff] 0.0
    $region29: #{tpu_custom_call.1} parent=1 // pred_fallthru
      _
    %v95 = vld [vmem:[#allocation4] sm:$0xff]
    %v96 = vld [vmem:[#allocation4 + $0x8] sm:$0xff]
    %v97 = vld [vmem:[#allocation7] sm:$0xff]
    %v98 = vld [vmem:[#allocation7 + $0x8] sm:$0xff]
    %v99 = vld [vmem:[#allocation9] sm:$0xff]
    %v100 = vld [vmem:[#allocation9 + $0x8] sm:$0xff]
    %v101 = vsub.f32 %v95, %v97
    %v102 = vsub.f32 %v96, %v98
    %v103 = vmul.f32 %v101, %v101
    %v104 = vmul.f32 %v102, %v102
    %v105 = vld [vmem:[#allocation2] sm:$0xff]
    %v106 = vadd.f32 %v103, %v104
    %v107 = vadd.f32 %v105, %v106
    %108 = vst [vmem:[#allocation2] sm:$0xff] %v107
    %v109 = vld [vmem:[#allocation3] sm:$0xff]
    %v110 = vadd.f32 %v99, %v100
    %v111 = vadd.f32 %v109, %v110
    %112 = vst [vmem:[#allocation3] sm:$0xff] %v111
    // Predicated region
    $region30: #{tpu_custom_call.1} parent=1 // pred_check
      %p113 = pneg %p89
    $region31: #{tpu_custom_call.1} parent=1 // pred_check_branch
      %115 = sbr.rel (%p113) target = $region33
    $region32: #{tpu_custom_call.1} parent=1 // pred_region
      %v116 = vld [vmem:[#allocation2] sm:$0xff]
      %117 = vadd.xlane.f32.xlu0 %v116
      %v118 = vpop.xlane.xlu0 %117
      %v119 = vrot.slane %v118, 4
      %v120 = vadd.f32 %v118, %v119
      %v121 = vrot.slane %v120, 2
      %v122 = vadd.f32 %v120, %v121
      %v123 = vrot.slane %v122, 1
      %v124 = vadd.f32 %v122, %v123
      %s125 = vtos %v124
      %s126 = scalar_lea.smem [#allocation10], 0
      %127 = sst [smem:[%s126]] %s125
      %v128 = vld [vmem:[#allocation3] sm:$0xff]
      %129 = vadd.xlane.f32.xlu0 %v128
      %v130 = vpop.xlane.xlu0 %129
      %v131 = vrot.slane %v130, 4
      %v132 = vadd.f32 %v130, %v131
      %v133 = vrot.slane %v132, 2
      %v134 = vadd.f32 %v132, %v133
      %v135 = vrot.slane %v134, 1
      %v136 = vadd.f32 %v134, %v135
      %s137 = vtos %v136
      %s138 = scalar_lea.smem [#allocation11], 0
      %139 = sst [smem:[%s138]] %s137
    $region33: #{tpu_custom_call.1} parent=1 // pred_fallthru
      _
    // Predicated region
    $region34: #{tpu_custom_call.1} parent=1 // pred_check
      _
    $region35: #{tpu_custom_call.1} parent=1 // pred_check_branch
      %141 = sbr.rel (0) target = $region37
    $region36: #{tpu_custom_call.1} parent=1 // pred_region
      %s143 = ssub.s32 16, 16
      %144 = vsyncadd [#allocation6], %s143
      %147 = dma.smem_to_hbm [#allocation10], 16, %s3, [#allocation6]
    $region37: #{tpu_custom_call.1} parent=1 // pred_fallthru
      _
    // Predicated region
    $region38: #{tpu_custom_call.1} parent=1 // pred_check
      _
    $region39: #{tpu_custom_call.1} parent=1 // pred_check_branch
      %149 = sbr.rel (0) target = $region41
    $region40: #{tpu_custom_call.1} parent=1 // pred_region
      %s151 = ssub.s32 16, 16
      %152 = vsyncadd [#allocation12], %s151
      %155 = dma.smem_to_hbm [#allocation11], 16, %s4, [#allocation12]
    $region41: #{tpu_custom_call.1} parent=1 // pred_fallthru
      _
    // Predicated region
    $region42: #{tpu_custom_call.1} parent=1 // pred_check
      _
    $region43: #{tpu_custom_call.1} parent=1 // pred_check_branch
      %157 = sbr.rel (0) target = $region45
    $region44: #{tpu_custom_call.1} parent=1 // pred_region
      %158 = dma.done [#allocation6], 16
    $region45: #{tpu_custom_call.1} parent=1 // pred_fallthru
      _
    // Predicated region
    $region46: #{tpu_custom_call.1} parent=1 // pred_check
      _
    $region47: #{tpu_custom_call.1} parent=1 // pred_check_branch
      %160 = sbr.rel (0) target = $region49
    $region48: #{tpu_custom_call.1} parent=1 // pred_region
      %161 = dma.done [#allocation12], 16
    $region49: #{tpu_custom_call.1} parent=1 // pred_fallthru
      _
    %162 = sfence
    %163 = vsyncpa [#allocation5], 1
    %164 = vsyncpa [#allocation8], 1
    %165 = vsyncpa [#allocation6], 1
    %166 = vsyncpa [#allocation12], 1

</llo_original>
